<compile_context>
chip_gen: v5e
topology: v5e:2x2
jax: 0.10.0
libtpu: 0.0.40
codegen_flags: <defaults>
</compile_context>

<pallas_src>
import functools

import jax
import jax.numpy as jnp
import numpy as np
from jax.experimental import pallas as pl
from jax.experimental.pallas import tpu as pltpu


def _round_up(x, m):
    return ((x + m - 1) // m) * m


def _rbf_kernel(d_ref, cw_ref, o_ref, *, inv_cutoff, k, p, block_rows):
    # d_ref : (TR, P)   packed distances (P consecutive D values per output row)
    # cw_ref: (2, 128)  row 0 = centers tiled P times, row 1 = widths tiled P times
    # o_ref : (TR, 128) lane-dense output slab
    d_cols = d_ref[...].astype(jnp.float32)                        # (TR, P)

    # Expand the P packed columns into a lane-dense (TR, 128) distance tile:
    # lanes [j*K, (j+1)*K) carry distance column j.
    lane = jax.lax.broadcasted_iota(jnp.int32, (block_rows, 128), 1)
    d = jnp.broadcast_to(d_cols[:, 0:1], (block_rows, 128))
    for j in range(1, p):
        d = jnp.where(lane >= j * k, d_cols[:, j : j + 1], d)

    # cutoff_fn(D): smooth quintic cutoff, evaluated once per distance lane.
    x = d * jnp.float32(inv_cutoff)                                # divide folded into a mul
    x3 = x * x * x
    poly = 1.0 - x3 * (x * (6.0 * x - 15.0) + 10.0)                # 1 - 6x^5 + 15x^4 - 10x^3
    cut = jnp.where(x < 1.0, poly, 0.0)

    e = jnp.exp(-d)                                                # exp(-D), once per lane

    centers = cw_ref[0:1, :].astype(jnp.float32)                   # (1, 128)
    widths = cw_ref[1:2, :].astype(jnp.float32)                    # (1, 128)
    diff = e - centers
    o_ref[...] = (cut * jnp.exp(-widths * (diff * diff))).astype(o_ref.dtype)


def rbf_forward(D, centers, widths, cutoff=10.0, *, block_rows=2048, out_dtype=None):
    """Pallas TPU forward of Graphormer's RBFLayer.  Returns shape D.shape + (K,)."""
    D = jnp.asarray(D)
    centers = jnp.asarray(centers, jnp.float32)
    widths = jnp.asarray(widths, jnp.float32)
    if out_dtype is None:
        out_dtype = D.dtype

    k = centers.shape[0]
    if 128 % k != 0:
        # TODO(synk): general K would need a padded-lane fallback; Graphormer uses K=64.
        raise NotImplementedError("lane-packed RBF kernel requires K to divide 128")
    p = 128 // k

    orig_shape = D.shape
    n = int(np.prod(orig_shape)) if orig_shape else 1
    d_flat = D.reshape(-1).astype(jnp.float32)

    rows_needed = -(-n // p)                                      # cdiv(n, p)
    br = _round_up(min(block_rows, _round_up(rows_needed, 8)), 8)
    rows_padded = _round_up(rows_needed, br)
    pad = rows_padded * p - n
    if pad:
        d_flat = jnp.pad(d_flat, (0, pad))                        # pad value 0 -> finite, sliced off
    d_packed = d_flat.reshape(rows_padded, p)

    # centers / widths tiled so one (1,128) row serves all P packed distance groups.
    cw = jnp.stack([jnp.tile(centers, p), jnp.tile(widths, p)], axis=0)   # (2, 128)

    kernel = functools.partial(
        _rbf_kernel, inv_cutoff=1.0 / float(cutoff), k=k, p=p, block_rows=br
    )
    out = pl.pallas_call(
        kernel,
        out_shape=jax.ShapeDtypeStruct((rows_padded, 128), out_dtype),
        grid=(rows_padded // br,),
        in_specs=[
            pl.BlockSpec((br, p), lambda i: (i, 0)),       # packed distances, streamed
            pl.BlockSpec((2, 128), lambda i: (0, 0)),      # params: same block every step
        ],
        out_specs=pl.BlockSpec((br, 128), lambda i: (i, 0)),
        compiler_params=pltpu.CompilerParams(dimension_semantics=("parallel",)),
    )(d_packed, cw)

    out = out.reshape(rows_padded * p, k)                         # pure row-major reshape
    if pad:
        out = out[:n]
    return out.reshape(orig_shape + (k,))


# ----------------------------- reference & parameter init -----------------------------

def _softplus_inverse(x):
    return x + np.log(-np.expm1(-x))


def _softplus(x):
    return np.logaddexp(0.0, x)


def make_rbf_params(K=64, cutoff=10.0):
    centers = _softplus(_softplus_inverse(np.linspace(1.0, np.exp(-cutoff), K)))
    widths = _softplus(
        np.full((K,), _softplus_inverse(0.5 / (1.0 - np.exp(-cutoff) / K) ** 2))
    )
    return centers.astype(np.float32), widths.astype(np.float32)


def rbf_reference(D, centers, widths, cutoff):
    D = D[..., None]
    x = D / cutoff
    cut = jnp.where(x < 1.0, 1.0 - 6.0 * x**5 + 15.0 * x**4 - 10.0 * x**3, 0.0)
    return cut * jnp.exp(-widths * (jnp.exp(-D) - centers) ** 2)


if __name__ == "__main__":
    key = jax.random.PRNGKey(0)
    K, cutoff = 64, 10.0
    centers, widths = make_rbf_params(K, cutoff)

    # Pairwise-distance style input (batch=2, 8x8 node pairs); values straddle the cutoff.
    D = jax.random.uniform(key, (2, 8, 8), jnp.float32, minval=0.0, maxval=12.0)

    out = rbf_forward(D, centers, widths, cutoff)
    out = jax.block_until_ready(out)

    ref = rbf_reference(D, jnp.asarray(centers), jnp.asarray(widths), cutoff)
    np.testing.assert_allclose(np.asarray(out), np.asarray(ref), rtol=1e-5, atol=1e-5)
    print("KERNEL_OK")
</pallas_src>

<mosaic_0001>
module attributes {stable_mosaic.version = 11 : i64} {
  func.func @_rbf_kernel(%arg0: i32, %arg1: memref<64x2xf32, #tpu.memory_space<vmem>>, %arg2: memref<2x128xf32, #tpu.memory_space<vmem>>, %arg3: memref<64x128xf32, #tpu.memory_space<vmem>>) attributes {dimension_semantics = [#tpu.dimension_semantics<parallel>], iteration_bounds = array<i64: 1>, scalar_prefetch = 0 : i64, scratch_operands = 0 : i64, tpu.core_type = #tpu.core_type<tc>, window_params = [{transform_indices = @transform_0, window_bounds = array<i64: 64, 2>}, {pipeline_mode = #tpu.pipeline_mode<synchronous>, transform_indices = @transform_1, window_bounds = array<i64: 2, 128>}, {transform_indices = @transform_2, window_bounds = array<i64: 64, 128>}]} {
    %c0 = arith.constant 0 : index
    %c0_0 = arith.constant 0 : index
    %0 = vector.load %arg1[%c0, %c0_0] : memref<64x2xf32, #tpu.memory_space<vmem>>, vector<64x2xf32>
    %1 = tpu.iota {dimensions = array<i32: 1>} : vector<64x128xi32>
    %2 = vector.extract_strided_slice %0 {offsets = [0, 0], sizes = [64, 1], strides = [1, 1]} : vector<64x2xf32> to vector<64x1xf32>
    %3 = vector.shape_cast %2 : vector<64x1xf32> to vector<64x1xf32>
    %4 = vector.broadcast %3 : vector<64x1xf32> to vector<64x128xf32>
    %c64_i32 = arith.constant 64 : i32
    %5 = vector.broadcast %c64_i32 : i32 to vector<64x128xi32>
    %6 = arith.cmpi sge, %1, %5 : vector<64x128xi32>
    %7 = vector.extract_strided_slice %0 {offsets = [0, 1], sizes = [64, 1], strides = [1, 1]} : vector<64x2xf32> to vector<64x1xf32>
    %8 = vector.shape_cast %7 : vector<64x1xf32> to vector<64x1xf32>
    %9 = vector.broadcast %8 : vector<64x1xf32> to vector<64x128xf32>
    %10 = arith.select %6, %9, %4 : vector<64x128xi1>, vector<64x128xf32>
    %cst = arith.constant 1.000000e-01 : f32
    %11 = vector.broadcast %cst : f32 to vector<64x128xf32>
    %12 = arith.mulf %10, %11 : vector<64x128xf32>
    %13 = arith.mulf %12, %12 : vector<64x128xf32>
    %14 = arith.mulf %13, %12 : vector<64x128xf32>
    %cst_1 = arith.constant 6.000000e+00 : f32
    %15 = vector.broadcast %cst_1 : f32 to vector<64x128xf32>
    %16 = arith.mulf %15, %12 : vector<64x128xf32>
    %cst_2 = arith.constant 1.500000e+01 : f32
    %17 = vector.broadcast %cst_2 : f32 to vector<64x128xf32>
    %18 = arith.subf %16, %17 : vector<64x128xf32>
    %19 = arith.mulf %12, %18 : vector<64x128xf32>
    %cst_3 = arith.constant 1.000000e+01 : f32
    %20 = vector.broadcast %cst_3 : f32 to vector<64x128xf32>
    %21 = arith.addf %19, %20 : vector<64x128xf32>
    %22 = arith.mulf %14, %21 : vector<64x128xf32>
    %cst_4 = arith.constant 1.000000e+00 : f32
    %23 = vector.broadcast %cst_4 : f32 to vector<64x128xf32>
    %24 = arith.subf %23, %22 : vector<64x128xf32>
    %cst_5 = arith.constant 1.000000e+00 : f32
    %25 = vector.broadcast %cst_5 : f32 to vector<64x128xf32>
    %26 = arith.cmpf olt, %12, %25 : vector<64x128xf32>
    %cst_6 = arith.constant 0.000000e+00 : f32
    %27 = vector.broadcast %cst_6 : f32 to vector<64x128xf32>
    %28 = arith.select %26, %24, %27 : vector<64x128xi1>, vector<64x128xf32>
    %cst_7 = arith.constant 0.000000e+00 : f32
    %29 = vector.broadcast %cst_7 : f32 to vector<64x128xf32>
    %30 = arith.subf %29, %10 : vector<64x128xf32>
    %31 = math.exp %30 : vector<64x128xf32>
    %c0_8 = arith.constant 0 : index
    %c0_9 = arith.constant 0 : index
    %32 = vector.load %arg2[%c0_8, %c0_9] : memref<2x128xf32, #tpu.memory_space<vmem>>, vector<1x128xf32>
    %c1 = arith.constant 1 : index
    %c0_10 = arith.constant 0 : index
    %33 = vector.load %arg2[%c1, %c0_10] : memref<2x128xf32, #tpu.memory_space<vmem>>, vector<1x128xf32>
    %34 = vector.broadcast %32 : vector<1x128xf32> to vector<64x128xf32>
    %35 = arith.subf %31, %34 : vector<64x128xf32>
    %cst_11 = arith.constant 0.000000e+00 : f32
    %36 = vector.broadcast %cst_11 : f32 to vector<1x128xf32>
    %37 = arith.subf %36, %33 : vector<1x128xf32>
    %38 = arith.mulf %35, %35 : vector<64x128xf32>
    %39 = vector.broadcast %37 : vector<1x128xf32> to vector<64x128xf32>
    %40 = arith.mulf %39, %38 : vector<64x128xf32>
    %41 = math.exp %40 : vector<64x128xf32>
    %42 = arith.mulf %28, %41 : vector<64x128xf32>
    %c0_12 = arith.constant 0 : index
    %c0_13 = arith.constant 0 : index
    %43 = vector.load %arg3[%c0_12, %c0_13] : memref<64x128xf32, #tpu.memory_space<vmem>>, vector<64x128xf32>
    tpu.vector_store %arg3[%c0_12, %c0_13], %42 {strides = array<i32>} : memref<64x128xf32, #tpu.memory_space<vmem>>, vector<64x128xf32>,
    return
  }
  func.func @transform_0(%arg0: i32) -> (i32, i32) {
    %c0_i32 = arith.constant 0 : i32
    %c0_i32_0 = arith.constant 0 : i32
    return %arg0, %c0_i32 : i32, i32
  }
  func.func @transform_1(%arg0: i32) -> (i32, i32) {
    %c0_i32 = arith.constant 0 : i32
    %c0_i32_0 = arith.constant 0 : i32
    %c0_i32_1 = arith.constant 0 : i32
    return %c0_i32, %c0_i32_0 : i32, i32
  }
  func.func @transform_2(%arg0: i32) -> (i32, i32) {
    %c0_i32 = arith.constant 0 : i32
    %c0_i32_0 = arith.constant 0 : i32
    return %arg0, %c0_i32 : i32, i32
  }
}

</mosaic_0001>

<llo_original>
// kernel: tpu_custom_call.1
$region0: #{tpu_custom_call.1}
  #allocation0 [shape = 'u32[]', space=smem, size = 0x4, offset = 0x4, fixed_abs, tag = 'smem constant byte address 0x4 - core index']
  #allocation1 [shape = 'u32[72,128]{1,0:T(1,128)}', space=vmem, size = 0x9000, scoped, tag = 'internal scratch']
  %s0 = inlined_call_operand.vmem [shape: f32[64,2], index: 0, kind: input, shape index: {}]
  %s1 = inlined_call_operand.vmem [shape: f32[2,128], index: 1, kind: input, shape index: {}]
  %s2 = inlined_call_operand.hbm [shape: f32[64,128], index: 2, kind: output, shape index: {}]
  %s3 = sld [smem:[#allocation0]]
  $region18: #{tpu_custom_call.1} parent=0
    _
  %s5 = ssub.s32 1, %s3
  %s6 = scalar_select 0, %s5, %s3
  $region1: #{tpu_custom_call.1} parent=0
    #allocation2 [shape = 'u8[32768]{0}', space=vmem, size = 0x8000, scoped, tag = 'output window, operand 0, single buffered']
    #allocation3 [shape = 's32[1]{0}', space=sflag, size = 0x4, scoped, tag = 'scoped memory for tpu_custom_call.1']
    %7 = vsyncpa [#allocation3], 0
    // Predicated region
    $region2: #{tpu_custom_call.1} parent=1 // pred_check
      _
    $region3: #{tpu_custom_call.1} parent=1 // pred_check_branch
      %9 = sbr.rel (0) target = $region5
    $region4: #{tpu_custom_call.1} parent=1 // pred_region
      _
    $region5: #{tpu_custom_call.1} parent=1 // pred_fallthru
      _
    // Predicated region
    $region6: #{tpu_custom_call.1} parent=1 // pred_check
      _
    $region7: #{tpu_custom_call.1} parent=1 // pred_check_branch
      %11 = sbr.rel (0) target = $region9
    $region8: #{tpu_custom_call.1} parent=1 // pred_region
      _
    $region9: #{tpu_custom_call.1} parent=1 // pred_fallthru
      _
    %v12 = vld [vmem:[%s0] sm:$0xff]
    %v13 = vld [vmem:[%s0 + $0x8] sm:$0xff]
    %v14 = vld [vmem:[%s0 + $0x10] sm:$0xff]
    %v15 = vld [vmem:[%s0 + $0x18] sm:$0xff]
    %v16 = vld [vmem:[%s0 + $0x20] sm:$0xff]
    %v17 = vld [vmem:[%s0 + $0x28] sm:$0xff]
    %v18 = vld [vmem:[%s0 + $0x30] sm:$0xff]
    %v19 = vld [vmem:[%s0 + $0x38] sm:$0xff]
    %v20 = vlaneseq
    %v21 = vand.u32 %v20, 127
    %23 = vset.pattern.permute.xlu0 0
    %24 = vperm.xlu0 %23, %v12
    %v25 = vpop.permute.xlu0 %24
    %28 = vset.pattern.permute.xlu0 0
    %29 = vperm.xlu0 %28, %v13
    %v30 = vpop.permute.xlu0 %29
    %33 = vset.pattern.permute.xlu0 0
    %34 = vperm.xlu0 %33, %v14
    %v35 = vpop.permute.xlu0 %34
    %38 = vset.pattern.permute.xlu0 0
    %39 = vperm.xlu0 %38, %v15
    %v40 = vpop.permute.xlu0 %39
    %43 = vset.pattern.permute.xlu0 0
    %44 = vperm.xlu0 %43, %v16
    %v45 = vpop.permute.xlu0 %44
    %48 = vset.pattern.permute.xlu0 0
    %49 = vperm.xlu0 %48, %v17
    %v50 = vpop.permute.xlu0 %49
    %53 = vset.pattern.permute.xlu0 0
    %54 = vperm.xlu0 %53, %v18
    %v55 = vpop.permute.xlu0 %54
    %58 = vset.pattern.permute.xlu0 0
    %59 = vperm.xlu0 %58, %v19
    %v60 = vpop.permute.xlu0 %59
    %vm62 = vcmp.ge.s32.totalorder %v21, 64
    %63 = vset.pattern.permute.xlu0 1
    %64 = vperm.xlu0 %63, %v12
    %v65 = vpop.permute.xlu0 %64
    %67 = vset.pattern.permute.xlu0 1
    %68 = vperm.xlu0 %67, %v13
    %v69 = vpop.permute.xlu0 %68
    %71 = vset.pattern.permute.xlu0 1
    %72 = vperm.xlu0 %71, %v14
    %v73 = vpop.permute.xlu0 %72
    %75 = vset.pattern.permute.xlu0 1
    %76 = vperm.xlu0 %75, %v15
    %v77 = vpop.permute.xlu0 %76
    %79 = vset.pattern.permute.xlu0 1
    %80 = vperm.xlu0 %79, %v16
    %v81 = vpop.permute.xlu0 %80
    %83 = vset.pattern.permute.xlu0 1
    %84 = vperm.xlu0 %83, %v17
    %v85 = vpop.permute.xlu0 %84
    %87 = vset.pattern.permute.xlu0 1
    %88 = vperm.xlu0 %87, %v18
    %v89 = vpop.permute.xlu0 %88
    %91 = vset.pattern.permute.xlu0 1
    %92 = vperm.xlu0 %91, %v19
    %v93 = vpop.permute.xlu0 %92
    %v95 = vsel %vm62, %v65, %v25
    %v96 = vsel %vm62, %v69, %v30
    %v97 = vsel %vm62, %v73, %v35
    %v98 = vsel %vm62, %v77, %v40
    %v99 = vsel %vm62, %v81, %v45
    %v100 = vsel %vm62, %v85, %v50
    %v101 = vsel %vm62, %v89, %v55
    %v102 = vsel %vm62, %v93, %v60
    %v103 = vmul.f32 %v95, 0.1
    %v104 = vmul.f32 %v96, 0.1
    %v105 = vmul.f32 %v97, 0.1
    %v106 = vmul.f32 %v98, 0.1
    %v107 = vmul.f32 %v99, 0.1
    %v108 = vmul.f32 %v100, 0.1
    %v109 = vmul.f32 %v101, 0.1
    %v110 = vmul.f32 %v102, 0.1
    %v111 = vmul.f32 %v103, %v103
    %v112 = vmul.f32 %v104, %v104
    %v113 = vmul.f32 %v105, %v105
    %v114 = vmul.f32 %v106, %v106
    %v115 = vmul.f32 %v107, %v107
    %v116 = vmul.f32 %v108, %v108
    %v117 = vmul.f32 %v109, %v109
    %v118 = vmul.f32 %v110, %v110
    %v119 = vmul.f32 %v111, %v103
    %v120 = vmul.f32 %v112, %v104
    %v121 = vmul.f32 %v113, %v105
    %v122 = vmul.f32 %v114, %v106
    %v123 = vmul.f32 %v115, %v107
    %v124 = vmul.f32 %v116, %v108
    %v125 = vmul.f32 %v117, %v109
    %v126 = vmul.f32 %v118, %v110
    %v127 = vmul.f32 %v103, 6.0
    %v128 = vmul.f32 %v104, 6.0
    %v129 = vmul.f32 %v105, 6.0
    %v130 = vmul.f32 %v106, 6.0
    %v131 = vmul.f32 %v107, 6.0
    %v132 = vmul.f32 %v108, 6.0
    %v133 = vmul.f32 %v109, 6.0
    %v134 = vmul.f32 %v110, 6.0
    %v135 = vsub.f32 %v127, 15.0
    %v136 = vsub.f32 %v128, 15.0
    %v137 = vsub.f32 %v129, 15.0
    %v138 = vsub.f32 %v130, 15.0
    %v139 = vsub.f32 %v131, 15.0
    %v140 = vsub.f32 %v132, 15.0
    %v141 = vsub.f32 %v133, 15.0
    %v142 = vsub.f32 %v134, 15.0
    %v143 = vmul.f32 %v103, %v135
    %v144 = vmul.f32 %v104, %v136
    %v145 = vmul.f32 %v105, %v137
    %v146 = vmul.f32 %v106, %v138
    %v147 = vmul.f32 %v107, %v139
    %v148 = vmul.f32 %v108, %v140
    %v149 = vmul.f32 %v109, %v141
    %v150 = vmul.f32 %v110, %v142
    %v151 = vadd.f32 %v143, 10.0
    %v152 = vadd.f32 %v144, 10.0
    %v153 = vadd.f32 %v145, 10.0
    %v154 = vadd.f32 %v146, 10.0
    %v155 = vadd.f32 %v147, 10.0
    %v156 = vadd.f32 %v148, 10.0
    %v157 = vadd.f32 %v149, 10.0
    %v158 = vadd.f32 %v150, 10.0
    %v159 = vmul.f32 %v119, %v151
    %v160 = vmul.f32 %v120, %v152
    %v161 = vmul.f32 %v121, %v153
    %v162 = vmul.f32 %v122, %v154
    %v163 = vmul.f32 %v123, %v155
    %v164 = vmul.f32 %v124, %v156
    %v165 = vmul.f32 %v125, %v157
    %v166 = vmul.f32 %v126, %v158
    %v167 = vsub.f32 1.0, %v159
    %v168 = vsub.f32 1.0, %v160
    %v169 = vsub.f32 1.0, %v161
    %v170 = vsub.f32 1.0, %v162
    %v171 = vsub.f32 1.0, %v163
    %v172 = vsub.f32 1.0, %v164
    %v173 = vsub.f32 1.0, %v165
    %v174 = vsub.f32 1.0, %v166
    %vm175 = vcmp.lt.f32.partialorder %v103, 1.0
    %vm176 = vcmp.lt.f32.partialorder %v104, 1.0
    %vm177 = vcmp.lt.f32.partialorder %v105, 1.0
    %vm178 = vcmp.lt.f32.partialorder %v106, 1.0
    %vm179 = vcmp.lt.f32.partialorder %v107, 1.0
    %vm180 = vcmp.lt.f32.partialorder %v108, 1.0
    %vm181 = vcmp.lt.f32.partialorder %v109, 1.0
    %vm182 = vcmp.lt.f32.partialorder %v110, 1.0
    %v183 = vsel %vm175, %v167, 0.0
    %v184 = vsel %vm176, %v168, 0.0
    %v185 = vsel %vm177, %v169, 0.0
    %v186 = vsel %vm178, %v170, 0.0
    %v187 = vsel %vm179, %v171, 0.0
    %v188 = vsel %vm180, %v172, 0.0
    %v189 = vsel %vm181, %v173, 0.0
    %v190 = vsel %vm182, %v174, 0.0
    %v191 = vsub.f32 0.0, %v95
    %v192 = vsub.f32 0.0, %v96
    %v193 = vsub.f32 0.0, %v97
    %v194 = vsub.f32 0.0, %v98
    %v195 = vsub.f32 0.0, %v99
    %v196 = vsub.f32 0.0, %v100
    %v197 = vsub.f32 0.0, %v101
    %v198 = vsub.f32 0.0, %v102
    %v199 = vmul.f32 %v191, 1.442695
    %v200 = vpow.pop %v199
    %v201 = vmul.f32 %v192, 1.442695
    %v202 = vpow.pop %v201
    %v203 = vmul.f32 %v193, 1.442695
    %v204 = vpow.pop %v203
    %v205 = vmul.f32 %v194, 1.442695
    %v206 = vpow.pop %v205
    %v207 = vmul.f32 %v195, 1.442695
    %v208 = vpow.pop %v207
    %v209 = vmul.f32 %v196, 1.442695
    %v210 = vpow.pop %v209
    %v211 = vmul.f32 %v197, 1.442695
    %v212 = vpow.pop %v211
    %v213 = vmul.f32 %v198, 1.442695
    %v214 = vpow.pop %v213
    %v215 = vld [vmem:[%s1] sm:$0x1]
    %v216 = vld [vmem:[%s1 + $0x1] sm:$0x1]
    %v217 = vperm.slane %v215, 0
    %v218 = vsub.f32 %v200, %v217
    %v219 = vsub.f32 %v202, %v217
    %v220 = vsub.f32 %v204, %v217
    %v221 = vsub.f32 %v206, %v217
    %v222 = vsub.f32 %v208, %v217
    %v223 = vsub.f32 %v210, %v217
    %v224 = vsub.f32 %v212, %v217
    %v225 = vsub.f32 %v214, %v217
    %v226 = vsub.f32 0.0, %v216
    %v227 = vmul.f32 %v218, %v218
    %v228 = vmul.f32 %v219, %v219
    %v229 = vmul.f32 %v220, %v220
    %v230 = vmul.f32 %v221, %v221
    %v231 = vmul.f32 %v222, %v222
    %v232 = vmul.f32 %v223, %v223
    %v233 = vmul.f32 %v224, %v224
    %v234 = vmul.f32 %v225, %v225
    %v235 = vperm.slane %v226, 0
    %v236 = vmul.f32 %v235, %v227
    %v237 = vmul.f32 %v235, %v228
    %v238 = vmul.f32 %v235, %v229
    %v239 = vmul.f32 %v235, %v230
    %v240 = vmul.f32 %v235, %v231
    %v241 = vmul.f32 %v235, %v232
    %v242 = vmul.f32 %v235, %v233
    %v243 = vmul.f32 %v235, %v234
    %v244 = vmul.f32 %v236, 1.442695
    %v245 = vpow.pop %v244
    %v246 = vmul.f32 %v237, 1.442695
    %v247 = vpow.pop %v246
    %v248 = vmul.f32 %v238, 1.442695
    %v249 = vpow.pop %v248
    %v250 = vmul.f32 %v239, 1.442695
    %v251 = vpow.pop %v250
    %v252 = vmul.f32 %v240, 1.442695
    %v253 = vpow.pop %v252
    %v254 = vmul.f32 %v241, 1.442695
    %v255 = vpow.pop %v254
    %v256 = vmul.f32 %v242, 1.442695
    %v257 = vpow.pop %v256
    %v258 = vmul.f32 %v243, 1.442695
    %v259 = vpow.pop %v258
    %v260 = vmul.f32 %v183, %v245
    %v261 = vmul.f32 %v184, %v247
    %v262 = vmul.f32 %v185, %v249
    %v263 = vmul.f32 %v186, %v251
    %v264 = vmul.f32 %v187, %v253
    %v265 = vmul.f32 %v188, %v255
    %v266 = vmul.f32 %v189, %v257
    %v267 = vmul.f32 %v190, %v259
    %268 = vst [vmem:[#allocation2] sm:$0xff] %v260
    %269 = vst [vmem:[#allocation2 + $0x8] sm:$0xff] %v261
    %270 = vst [vmem:[#allocation2 + $0x10] sm:$0xff] %v262
    %271 = vst [vmem:[#allocation2 + $0x18] sm:$0xff] %v263
    %272 = vst [vmem:[#allocation2 + $0x20] sm:$0xff] %v264
    %273 = vst [vmem:[#allocation2 + $0x28] sm:$0xff] %v265
    %274 = vst [vmem:[#allocation2 + $0x30] sm:$0xff] %v266
    %275 = vst [vmem:[#allocation2 + $0x38] sm:$0xff] %v267
    // Predicated region
    $region10: #{tpu_custom_call.1} parent=1 // pred_check
      _
    $region11: #{tpu_custom_call.1} parent=1 // pred_check_branch
      %277 = sbr.rel (0) target = $region13
    $region12: #{tpu_custom_call.1} parent=1 // pred_region
      %279 = vsyncadd [#allocation3], 0
      %s280 = sshll.u32 [#allocation2], 4
      %s281 = int_to_ptr.vmem [resolvable:$true] %s280
      %s282 = sshll.u32 %s2, 4
      %s283 = int_to_ptr.hbm [resolvable:$true] %s282
      %288 = dma.vmem_to_hbm [thread:$0]  %s281, 1024, %s283, [#allocation3], 128, 128, 8
    $region13: #{tpu_custom_call.1} parent=1 // pred_fallthru
      _
    // Predicated region
    $region14: #{tpu_custom_call.1} parent=1 // pred_check
      _
    $region15: #{tpu_custom_call.1} parent=1 // pred_check_branch
      %290 = sbr.rel (0) target = $region17
    $region16: #{tpu_custom_call.1} parent=1 // pred_region
      %292 = dma.done [#allocation3], 1024
    $region17: #{tpu_custom_call.1} parent=1 // pred_fallthru
      _
    %293 = vsyncpa [#allocation3], 1

</llo_original>
